<compile_context>
chip_gen: v7x
topology: tpu7x:2x2x1
jax: 0.10.0
libtpu: 0.0.40
codegen_flags: <defaults>
</compile_context>

<pallas_src>
import jax
import jax.numpy as jnp
from jax.experimental import pallas as pl
from jax.experimental.pallas import tpu as pltpu


def _fused_1x1_kernel(x_ref, w1_ref, b1_ref, w2_ref, b2_ref, o_ref):
    # x_ref:  (1, 3, TILE_P)  VMEM  -- pixel tile, channels on sublanes, pixels on lanes
    # w1_ref: (3, 3)          SMEM  -- conv1 weight [out_c, in_c]
    # b1_ref: (3,)            SMEM  -- conv1 bias
    # w2_ref: (3,)            SMEM  -- conv2 weight (single output channel)
    # b2_ref: (1,)            SMEM  -- conv2 bias
    # o_ref:  (1, 1, TILE_P)  VMEM
    x = x_ref[0]                      # (3, TILE_P) f32
    x0 = x[0:1, :]                    # (1, TILE_P)
    x1 = x[1:2, :]
    x2 = x[2:3, :]

    # conv1 (1x1): unrolled per-output-channel FMAs, scalar weights broadcast
    # from SMEM -> pure VPU work, no MXU push/pop.
    h0 = w1_ref[0, 0] * x0 + w1_ref[0, 1] * x1 + w1_ref[0, 2] * x2 + b1_ref[0]
    h1 = w1_ref[1, 0] * x0 + w1_ref[1, 1] * x1 + w1_ref[1, 2] * x2 + b1_ref[1]
    h2 = w1_ref[2, 0] * x0 + w1_ref[2, 1] * x1 + w1_ref[2, 2] * x2 + b1_ref[2]

    # SiLU: h * sigmoid(h)  (sigmoid lowers to the EUP -- separate issue slot)
    h0 = h0 * jax.nn.sigmoid(h0)
    h1 = h1 * jax.nn.sigmoid(h1)
    h2 = h2 * jax.nn.sigmoid(h2)

    # conv2 (1x1): 3 -> 1 channel
    y = w2_ref[0] * h0 + w2_ref[1] * h1 + w2_ref[2] * h2 + b2_ref[0]

    # Lane-dense store: (1, TILE_P) into the (1, 1, TILE_P) output block.
    o_ref[0] = y.astype(o_ref.dtype)


def fused_conv_silu_conv(x_nchw, w1, b1, w2, b2, *, max_tile_p=131072):
    """x_nchw: (N, 3, H, W) float32. Returns (N, 1, H, W) float32.

    w1: (3, 3, 1, 1)  [out_c, in_c, kh, kw]  (PyTorch conv weight layout)
    b1: (3,)
    w2: (1, 3, 1, 1)
    b2: (1,)
    """
    N, C_in, H, W = x_nchw.shape
    C_mid = w1.shape[0]
    C_out = w2.shape[0]
    HW = H * W

    # Free reshape: NCHW already has the spatial (pixel) axis contiguous last.
    x_flat = x_nchw.reshape(N, C_in, HW)

    # Pick a lane-dense pixel tile. For small inputs one grid step covers the
    # whole spatial extent (block last dim == full array dim, always legal).
    if HW <= max_tile_p:
        tile_p = HW
        hw_pad = HW
    else:
        tile_p = max_tile_p  # multiple of 128
        hw_pad = ((HW + tile_p - 1) // tile_p) * tile_p

    if hw_pad != HW:
        # Only taken for very large, non-tile-aligned spatial sizes; no-op for
        # the shapes exercised here (so no extra HBM pad pass in practice).
        x_flat = jnp.pad(x_flat, ((0, 0), (0, 0), (0, hw_pad - HW)))

    # Weights / biases as tiny SMEM-resident scalar tables.
    w1_s = w1.reshape(C_mid, C_in)                 # (3, 3)  [out, in]
    b1_s = b1.reshape(C_mid)                       # (3,)
    w2_s = w2.reshape(C_out, C_mid).reshape(C_mid)  # (3,)
    b2_s = b2.reshape(C_out)                       # (1,)

    grid = (N, hw_pad // tile_p)

    out_flat = pl.pallas_call(
        _fused_1x1_kernel,
        out_shape=jax.ShapeDtypeStruct((N, C_out, hw_pad), jnp.float32),
        grid_spec=pltpu.PrefetchScalarGridSpec(
            num_scalar_prefetch=0,
            grid=grid,
            in_specs=[
                pl.BlockSpec((1, C_in, tile_p), lambda n, p: (n, 0, p)),
                pl.BlockSpec(memory_space=pltpu.MemorySpace.SMEM),
                pl.BlockSpec(memory_space=pltpu.MemorySpace.SMEM),
                pl.BlockSpec(memory_space=pltpu.MemorySpace.SMEM),
                pl.BlockSpec(memory_space=pltpu.MemorySpace.SMEM),
            ],
            out_specs=pl.BlockSpec((1, C_out, tile_p), lambda n, p: (n, 0, p)),
        ),
        compiler_params=pltpu.CompilerParams(
            dimension_semantics=("parallel", "parallel")),
    )(x_flat, w1_s, b1_s, w2_s, b2_s)

    # Free reshape back to NCHW (drop pixel padding if any).
    out = out_flat[:, :, :HW].reshape(N, C_out, H, W)
    return out


def _reference(x_nchw, w1, b1, w2, b2):
    """Pure-JAX reference (lax conv) for correctness check."""
    y = jax.lax.conv_general_dilated(
        x_nchw, w1, window_strides=(1, 1), padding="VALID",
        dimension_numbers=("NCHW", "OIHW", "NCHW"))
    y = y + b1.reshape(1, -1, 1, 1)
    y = y * jax.nn.sigmoid(y)
    y = jax.lax.conv_general_dilated(
        y, w2, window_strides=(1, 1), padding="VALID",
        dimension_numbers=("NCHW", "OIHW", "NCHW"))
    y = y + b2.reshape(1, -1, 1, 1)
    return y


if __name__ == "__main__":
    key = jax.random.PRNGKey(0)
    k_x, k_w1, k_b1, k_w2, k_b2 = jax.random.split(key, 5)

    # Small shapes consistent with the module: batch=2, in_channels=3, 16x16.
    N, H, W = 2, 16, 16
    x = jax.random.normal(k_x, (N, 3, H, W), dtype=jnp.float32)

    # Deterministic parameter init (shapes per nn.Conv2d(3,3,1,1) / (3,1,1,1)).
    w1 = 0.1 * jax.random.normal(k_w1, (3, 3, 1, 1), dtype=jnp.float32)
    b1 = 0.1 * jax.random.normal(k_b1, (3,), dtype=jnp.float32)
    w2 = 0.1 * jax.random.normal(k_w2, (1, 3, 1, 1), dtype=jnp.float32)
    b2 = 0.1 * jax.random.normal(k_b2, (1,), dtype=jnp.float32)

    out = fused_conv_silu_conv(x, w1, b1, w2, b2)
    out = jax.block_until_ready(out)

    ref = jax.block_until_ready(_reference(x, w1, b1, w2, b2))
    assert out.shape == (N, 1, H, W), out.shape
    assert jnp.allclose(out, ref, atol=1e-5, rtol=1e-5), \
        float(jnp.max(jnp.abs(out - ref)))

    print("KERNEL_OK")
</pallas_src>

<mosaic_0001>
module attributes {stable_mosaic.version = 11 : i64} {
  func.func @_fused_1x1_kernel(%arg0: i32, %arg1: i32, %arg2: memref<1x3x256xf32, #tpu.memory_space<vmem>>, %arg3: memref<3x3xf32, #tpu.memory_space<smem>>, %arg4: memref<3xf32, #tpu.memory_space<smem>>, %arg5: memref<3xf32, #tpu.memory_space<smem>>, %arg6: memref<1xf32, #tpu.memory_space<smem>>, %arg7: memref<1x1x256xf32, #tpu.memory_space<vmem>>) attributes {dimension_semantics = [#tpu.dimension_semantics<parallel>, #tpu.dimension_semantics<parallel>], iteration_bounds = array<i64: 2, 1>, scalar_prefetch = 0 : i64, scratch_operands = 0 : i64, tpu.core_type = #tpu.core_type<tc>, window_params = [{transform_indices = @transform_0, window_bounds = array<i64: 1, 3, 256>}, {transform_indices = @transform_1, window_bounds = array<i64: 3, 3>}, {transform_indices = @transform_2, window_bounds = array<i64: 3>}, {transform_indices = @transform_3, window_bounds = array<i64: 3>}, {transform_indices = @transform_4, window_bounds = array<i64: 1>}, {transform_indices = @transform_5, window_bounds = array<i64: 1, 1, 256>}]} {
    %c0 = arith.constant 0 : index
    %c0_0 = arith.constant 0 : index
    %c0_1 = arith.constant 0 : index
    %0 = vector.load %arg2[%c0, %c0_0, %c0_1] : memref<1x3x256xf32, #tpu.memory_space<vmem>>, vector<1x3x256xf32>
    %1 = vector.shape_cast %0 : vector<1x3x256xf32> to vector<3x256xf32>
    %2 = vector.extract_strided_slice %1 {offsets = [0, 0], sizes = [1, 256], strides = [1, 1]} : vector<3x256xf32> to vector<1x256xf32>
    %3 = vector.extract_strided_slice %1 {offsets = [1, 0], sizes = [1, 256], strides = [1, 1]} : vector<3x256xf32> to vector<1x256xf32>
    %4 = vector.extract_strided_slice %1 {offsets = [2, 0], sizes = [1, 256], strides = [1, 1]} : vector<3x256xf32> to vector<1x256xf32>
    %c0_2 = arith.constant 0 : index
    %c0_3 = arith.constant 0 : index
    %5 = memref.load %arg3[%c0_2, %c0_3] : memref<3x3xf32, #tpu.memory_space<smem>>
    %6 = vector.broadcast %5 : f32 to vector<1x256xf32>
    %7 = arith.mulf %6, %2 : vector<1x256xf32>
    %c0_4 = arith.constant 0 : index
    %c1 = arith.constant 1 : index
    %8 = memref.load %arg3[%c0_4, %c1] : memref<3x3xf32, #tpu.memory_space<smem>>
    %9 = vector.broadcast %8 : f32 to vector<1x256xf32>
    %10 = arith.mulf %9, %3 : vector<1x256xf32>
    %11 = arith.addf %7, %10 : vector<1x256xf32>
    %c0_5 = arith.constant 0 : index
    %c2 = arith.constant 2 : index
    %12 = memref.load %arg3[%c0_5, %c2] : memref<3x3xf32, #tpu.memory_space<smem>>
    %13 = vector.broadcast %12 : f32 to vector<1x256xf32>
    %14 = arith.mulf %13, %4 : vector<1x256xf32>
    %15 = arith.addf %11, %14 : vector<1x256xf32>
    %c0_6 = arith.constant 0 : index
    %16 = memref.load %arg4[%c0_6] : memref<3xf32, #tpu.memory_space<smem>>
    %17 = vector.broadcast %16 : f32 to vector<1x256xf32>
    %18 = arith.addf %15, %17 : vector<1x256xf32>
    %c1_7 = arith.constant 1 : index
    %c0_8 = arith.constant 0 : index
    %19 = memref.load %arg3[%c1_7, %c0_8] : memref<3x3xf32, #tpu.memory_space<smem>>
    %20 = vector.broadcast %19 : f32 to vector<1x256xf32>
    %21 = arith.mulf %20, %2 : vector<1x256xf32>
    %c1_9 = arith.constant 1 : index
    %c1_10 = arith.constant 1 : index
    %22 = memref.load %arg3[%c1_9, %c1_10] : memref<3x3xf32, #tpu.memory_space<smem>>
    %23 = vector.broadcast %22 : f32 to vector<1x256xf32>
    %24 = arith.mulf %23, %3 : vector<1x256xf32>
    %25 = arith.addf %21, %24 : vector<1x256xf32>
    %c1_11 = arith.constant 1 : index
    %c2_12 = arith.constant 2 : index
    %26 = memref.load %arg3[%c1_11, %c2_12] : memref<3x3xf32, #tpu.memory_space<smem>>
    %27 = vector.broadcast %26 : f32 to vector<1x256xf32>
    %28 = arith.mulf %27, %4 : vector<1x256xf32>
    %29 = arith.addf %25, %28 : vector<1x256xf32>
    %c1_13 = arith.constant 1 : index
    %30 = memref.load %arg4[%c1_13] : memref<3xf32, #tpu.memory_space<smem>>
    %31 = vector.broadcast %30 : f32 to vector<1x256xf32>
    %32 = arith.addf %29, %31 : vector<1x256xf32>
    %c2_14 = arith.constant 2 : index
    %c0_15 = arith.constant 0 : index
    %33 = memref.load %arg3[%c2_14, %c0_15] : memref<3x3xf32, #tpu.memory_space<smem>>
    %34 = vector.broadcast %33 : f32 to vector<1x256xf32>
    %35 = arith.mulf %34, %2 : vector<1x256xf32>
    %c2_16 = arith.constant 2 : index
    %c1_17 = arith.constant 1 : index
    %36 = memref.load %arg3[%c2_16, %c1_17] : memref<3x3xf32, #tpu.memory_space<smem>>
    %37 = vector.broadcast %36 : f32 to vector<1x256xf32>
    %38 = arith.mulf %37, %3 : vector<1x256xf32>
    %39 = arith.addf %35, %38 : vector<1x256xf32>
    %c2_18 = arith.constant 2 : index
    %c2_19 = arith.constant 2 : index
    %40 = memref.load %arg3[%c2_18, %c2_19] : memref<3x3xf32, #tpu.memory_space<smem>>
    %41 = vector.broadcast %40 : f32 to vector<1x256xf32>
    %42 = arith.mulf %41, %4 : vector<1x256xf32>
    %43 = arith.addf %39, %42 : vector<1x256xf32>
    %c2_20 = arith.constant 2 : index
    %44 = memref.load %arg4[%c2_20] : memref<3xf32, #tpu.memory_space<smem>>
    %45 = vector.broadcast %44 : f32 to vector<1x256xf32>
    %46 = arith.addf %43, %45 : vector<1x256xf32>
    %47 = arith.negf %18 : vector<1x256xf32>
    %48 = math.exp %47 : vector<1x256xf32>
    %cst = arith.constant 1.000000e+00 : f32
    %49 = vector.broadcast %cst : f32 to vector<1x256xf32>
    %50 = arith.addf %49, %48 : vector<1x256xf32>
    %51 = arith.divf %49, %50 : vector<1x256xf32>
    %52 = arith.mulf %18, %51 : vector<1x256xf32>
    %53 = arith.negf %32 : vector<1x256xf32>
    %54 = math.exp %53 : vector<1x256xf32>
    %cst_21 = arith.constant 1.000000e+00 : f32
    %55 = vector.broadcast %cst_21 : f32 to vector<1x256xf32>
    %56 = arith.addf %55, %54 : vector<1x256xf32>
    %57 = arith.divf %55, %56 : vector<1x256xf32>
    %58 = arith.mulf %32, %57 : vector<1x256xf32>
    %59 = arith.negf %46 : vector<1x256xf32>
    %60 = math.exp %59 : vector<1x256xf32>
    %cst_22 = arith.constant 1.000000e+00 : f32
    %61 = vector.broadcast %cst_22 : f32 to vector<1x256xf32>
    %62 = arith.addf %61, %60 : vector<1x256xf32>
    %63 = arith.divf %61, %62 : vector<1x256xf32>
    %64 = arith.mulf %46, %63 : vector<1x256xf32>
    %c0_23 = arith.constant 0 : index
    %65 = memref.load %arg5[%c0_23] : memref<3xf32, #tpu.memory_space<smem>>
    %66 = vector.broadcast %65 : f32 to vector<1x256xf32>
    %67 = arith.mulf %66, %52 : vector<1x256xf32>
    %c1_24 = arith.constant 1 : index
    %68 = memref.load %arg5[%c1_24] : memref<3xf32, #tpu.memory_space<smem>>
    %69 = vector.broadcast %68 : f32 to vector<1x256xf32>
    %70 = arith.mulf %69, %58 : vector<1x256xf32>
    %71 = arith.addf %67, %70 : vector<1x256xf32>
    %c2_25 = arith.constant 2 : index
    %72 = memref.load %arg5[%c2_25] : memref<3xf32, #tpu.memory_space<smem>>
    %73 = vector.broadcast %72 : f32 to vector<1x256xf32>
    %74 = arith.mulf %73, %64 : vector<1x256xf32>
    %75 = arith.addf %71, %74 : vector<1x256xf32>
    %c0_26 = arith.constant 0 : index
    %76 = memref.load %arg6[%c0_26] : memref<1xf32, #tpu.memory_space<smem>>
    %77 = vector.broadcast %76 : f32 to vector<1x256xf32>
    %78 = arith.addf %75, %77 : vector<1x256xf32>
    %c0_27 = arith.constant 0 : index
    %c0_28 = arith.constant 0 : index
    %c0_29 = arith.constant 0 : index
    %79 = vector.load %arg7[%c0_27, %c0_28, %c0_29] : memref<1x1x256xf32, #tpu.memory_space<vmem>>, vector<1x1x256xf32>
    %80 = vector.shape_cast %79 : vector<1x1x256xf32> to vector<1x256xf32>
    %81 = vector.shape_cast %78 : vector<1x256xf32> to vector<1x1x256xf32>
    tpu.vector_store %arg7[%c0_27, %c0_28, %c0_29], %81 {strides = array<i32>} : memref<1x1x256xf32, #tpu.memory_space<vmem>>, vector<1x1x256xf32>,
    return
  }
  func.func @transform_0(%arg0: i32, %arg1: i32) -> (i32, i32, i32) {
    %c0_i32 = arith.constant 0 : i32
    %c0_i32_0 = arith.constant 0 : i32
    return %arg0, %c0_i32, %arg1 : i32, i32, i32
  }
  func.func @transform_1(%arg0: i32, %arg1: i32) -> (i32, i32) {
    %c0_i32 = arith.constant 0 : i32
    %c0_i32_0 = arith.constant 0 : i32
    %c0_i32_1 = arith.constant 0 : i32
    return %c0_i32, %c0_i32_0 : i32, i32
  }
  func.func @transform_2(%arg0: i32, %arg1: i32) -> i32 {
    %c0_i32 = arith.constant 0 : i32
    %c0_i32_0 = arith.constant 0 : i32
    return %c0_i32 : i32
  }
  func.func @transform_3(%arg0: i32, %arg1: i32) -> i32 {
    %c0_i32 = arith.constant 0 : i32
    %c0_i32_0 = arith.constant 0 : i32
    return %c0_i32 : i32
  }
  func.func @transform_4(%arg0: i32, %arg1: i32) -> i32 {
    %c0_i32 = arith.constant 0 : i32
    %c0_i32_0 = arith.constant 0 : i32
    return %c0_i32 : i32
  }
  func.func @transform_5(%arg0: i32, %arg1: i32) -> (i32, i32, i32) {
    %c0_i32 = arith.constant 0 : i32
    %c0_i32_0 = arith.constant 0 : i32
    return %arg0, %c0_i32, %arg1 : i32, i32, i32
  }
}

</mosaic_0001>

<llo_original>
// kernel: tpu_custom_call.1
$region0: #{tpu_custom_call.1}
  #allocation0 [shape = 'u32[]', space=smem, size = 0x4, offset = 0x4, fixed_abs, tag = 'smem constant byte address 0x4 - core index']
  #allocation1 [shape = 'u32[144,128]{1,0:T(1,128)}', space=vmem, size = 0x12000, scoped, tag = 'internal scratch']
  #allocation2 [shape = 'f32[1]{0:T(128)S(6)}', space=smem, size = 0x200, scoped, tag = 'scoped memory for tpu_custom_call.1']
  %s0 = inlined_call_operand.vmem [shape: f32[2,3,256], index: 0, kind: input, shape index: {}]
  %s1 = inlined_call_operand.vmem [shape: f32[3,3], index: 1, kind: input, shape index: {}]
  %s2 = inlined_call_operand.vmem [shape: f32[3], index: 2, kind: input, shape index: {}]
  %s3 = inlined_call_operand.vmem [shape: f32[3], index: 3, kind: input, shape index: {}]
  %s4 = inlined_call_operand.<no memory space> [shape: f32[1], index: 4, kind: input, shape index: {}]
  %s5 = inlined_call_operand.hbm [shape: f32[2,1,256], index: 5, kind: output, shape index: {}]
  %s6 = sld [smem:[#allocation0]]
  $region65: #{tpu_custom_call.1} parent=0
    _
  %s8 = ssub.s32 1, %s6
  %s9 = scalar_select 0, %s8, %s6
  %10 = sst [smem:[#allocation2]] %s4
  $region1: #{tpu_custom_call.1} parent=0
    #allocation3 [shape = 'u8[2048]{0}', space=smem, size = 0x800, scoped, tag = 'input window, operand 1, single buffered']
    #allocation4 [shape = 's32[2]{0}', space=sflag, size = 0x8, scoped, tag = 'scoped memory for tpu_custom_call.1']
    #allocation5 [shape = 's32[2]{0}', space=sflag, size = 0x8, scoped, tag = 'scoped memory for tpu_custom_call.1']
    #allocation6 [shape = 'u8[512]{0}', space=smem, size = 0x200, scoped, tag = 'input window, operand 2, single buffered']
    #allocation7 [shape = 's32[1]{0}', space=sflag, size = 0x4, scoped, tag = 'scoped memory for tpu_custom_call.1']
    #allocation8 [shape = 'u8[512]{0}', space=smem, size = 0x200, scoped, tag = 'input window, operand 3, single buffered']
    #allocation9 [shape = 'u8[2048]{0}', space=vmem, size = 0x800, scoped, tag = 'output window, operand 0']
    %11 = vsyncpa [#allocation5], 0
    %12 = vsyncpa [#allocation7], 0
    %13 = vsyncpa [#allocation4], 0
    %s14 = scalar_lea.sflag [#allocation4], 1
    %15 = vsyncpa %s14, 0
    loop: start=0, step=1, limit=4
    $region2: #{tpu_custom_call.1} parent=1 // loop_pre_header
      _
    $region3: #{tpu_custom_call.1} parent=1 // loop_header
      %s17 = sphi 0, %s21
      %p18 = scmp.ge.s32.totalorder %s17, 4
      %s24 = sphi 0, %s36
      %s25 = sphi 0, %s32
      %s26 = sphi 0, %s24
      %s27 = sphi 0, %s25
      %s28 = sphi 0, %s26
      %s29 = sphi 0, %s27
      %s41 = sphi 0, %s43
      %s44 = sphi 0, %s41
      %s45 = sphi 0, %s44
      %s61 = sphi 0, %s45
      %s65 = sphi 0, %s65
      %s67 = sphi 0, %s65
      %s68 = sphi 0, %s67
      %s82 = sphi 0, %s68
      %s86 = sphi 0, %s86
      %s88 = sphi 0, %s86
      %s89 = sphi 0, %s88
      %s103 = sphi 0, %s89
      %s107 = sphi 0, %s107
      %s109 = sphi 0, %s107
      %s110 = sphi 0, %s109
      %s124 = sphi 0, %s110
      %s128 = sphi 0, %s128
      %s130 = sphi 0, %s128
      %s131 = sphi 0, %s130
      %s145 = sphi 0, %s131
      %s153 = sphi 0, %s155
      %s156 = sphi 0, %s153
      %s157 = sphi 0, %s156
      %s173 = sphi 0, %s157
    $region4: #{tpu_custom_call.1} parent=1 // loop_header_branch
      %20 = sbr.rel (%p18) target = $region8
    $region5: #{tpu_custom_call.1} parent=1 // loop_body
      %s22 = ssub.s32 %s17, 1
      %s23 = ssub.s32 %s17, 2
      %s30 = sadd.s32 1, %s25
      %p31 = scmp.ge.s32.totalorder %s30, 1
      %s32 = scalar_select %p31, 0, %s30
      %s33 = sadd.s32 1, %s24
      %s34 = scalar_select %p31, %s33, %s24
      %p35 = scmp.ge.s32.totalorder %s34, 2
      %s36 = scalar_select %p35, 0, %s34
      %s37 = ssub.s32 %s24, %s36
      %s38 = ssub.s32 %s25, %s32
      %s39 = sor.u32 %s37, %s38
      %p40 = scmp.eq.s32.totalorder %s39, 0
      %s42 = sadd.s32 %s41, 1
      %s43 = scalar_select %p40, %s41, %s42
      %p46 = pneg %p40
      %p47 = scmp.eq.s32.totalorder %s17, 1
      %p48 = por %p46, %p47
      %p49 = scmp.ne.s32.totalorder %s41, %s44
      %p50 = scmp.eq.s32.totalorder %s17, 0
      %p51 = por %p49, %p50
      %p52 = scmp.ne.s32.totalorder %s41, %s44
      %p53 = scmp.eq.s32.totalorder %s22, 1
      %p54 = por %p52, %p53
      %p55 = scmp.ne.s32.totalorder %s44, %s45
      %p56 = scmp.eq.s32.totalorder %s22, 0
      %p57 = por %p55, %p56
      %p58 = scmp.ne.s32.totalorder %s44, %s45
      %p59 = scmp.eq.s32.totalorder %s23, 1
      %p60 = por %p58, %p59
      %p62 = scmp.ne.s32.totalorder %s45, %s61
      %p63 = scmp.eq.s32.totalorder %s23, 0
      %p64 = por %p62, %p63
      %s66 = sadd.s32 %s65, 1
      %p69 = scmp.eq.s32.totalorder %s17, 1
      %p70 = scmp.ne.s32.totalorder %s65, %s67
      %p71 = scmp.eq.s32.totalorder %s17, 0
      %p72 = por %p70, %p71
      %p73 = scmp.ne.s32.totalorder %s65, %s67
      %p74 = scmp.eq.s32.totalorder %s22, 1
      %p75 = por %p73, %p74
      %p76 = scmp.ne.s32.totalorder %s67, %s68
      %p77 = scmp.eq.s32.totalorder %s22, 0
      %p78 = por %p76, %p77
      %p79 = scmp.ne.s32.totalorder %s67, %s68
      %p80 = scmp.eq.s32.totalorder %s23, 1
      %p81 = por %p79, %p80
      %p83 = scmp.ne.s32.totalorder %s68, %s82
      %p84 = scmp.eq.s32.totalorder %s23, 0
      %p85 = por %p83, %p84
      %s87 = sadd.s32 %s86, 1
      %p90 = scmp.eq.s32.totalorder %s17, 1
      %p91 = scmp.ne.s32.totalorder %s86, %s88
      %p92 = scmp.eq.s32.totalorder %s17, 0
      %p93 = por %p91, %p92
      %p94 = scmp.ne.s32.totalorder %s86, %s88
      %p95 = scmp.eq.s32.totalorder %s22, 1
      %p96 = por %p94, %p95
      %p97 = scmp.ne.s32.totalorder %s88, %s89
      %p98 = scmp.eq.s32.totalorder %s22, 0
      %p99 = por %p97, %p98
      %p100 = scmp.ne.s32.totalorder %s88, %s89
      %p101 = scmp.eq.s32.totalorder %s23, 1
      %p102 = por %p100, %p101
      %p104 = scmp.ne.s32.totalorder %s89, %s103
      %p105 = scmp.eq.s32.totalorder %s23, 0
      %p106 = por %p104, %p105
      %s108 = sadd.s32 %s107, 1
      %p111 = scmp.eq.s32.totalorder %s17, 1
      %p112 = scmp.ne.s32.totalorder %s107, %s109
      %p113 = scmp.eq.s32.totalorder %s17, 0
      %p114 = por %p112, %p113
      %p115 = scmp.ne.s32.totalorder %s107, %s109
      %p116 = scmp.eq.s32.totalorder %s22, 1
      %p117 = por %p115, %p116
      %p118 = scmp.ne.s32.totalorder %s109, %s110
      %p119 = scmp.eq.s32.totalorder %s22, 0
      %p120 = por %p118, %p119
      %p121 = scmp.ne.s32.totalorder %s109, %s110
      %p122 = scmp.eq.s32.totalorder %s23, 1
      %p123 = por %p121, %p122
      %p125 = scmp.ne.s32.totalorder %s110, %s124
      %p126 = scmp.eq.s32.totalorder %s23, 0
      %p127 = por %p125, %p126
      %s129 = sadd.s32 %s128, 1
      %p132 = scmp.eq.s32.totalorder %s17, 1
      %p133 = scmp.ne.s32.totalorder %s128, %s130
      %p134 = scmp.eq.s32.totalorder %s17, 0
      %p135 = por %p133, %p134
      %p136 = scmp.ne.s32.totalorder %s128, %s130
      %p137 = scmp.eq.s32.totalorder %s22, 1
      %p138 = por %p136, %p137
      %p139 = scmp.ne.s32.totalorder %s130, %s131
      %p140 = scmp.eq.s32.totalorder %s22, 0
      %p141 = por %p139, %p140
      %p142 = scmp.ne.s32.totalorder %s130, %s131
      %p143 = scmp.eq.s32.totalorder %s23, 1
      %p144 = por %p142, %p143
      %p146 = scmp.ne.s32.totalorder %s131, %s145
      %p147 = scmp.eq.s32.totalorder %s23, 0
      %p148 = por %p146, %p147
      %s149 = ssub.s32 %s24, %s36
      %s150 = ssub.s32 %s25, %s32
      %s151 = sor.u32 %s149, %s150
      %p152 = scmp.eq.s32.totalorder %s151, 0
      %s154 = sadd.s32 %s153, 1
      %s155 = scalar_select %p152, %s153, %s154
      %p158 = pneg %p152
      %p159 = scmp.eq.s32.totalorder %s17, 1
      %p160 = por %p158, %p159
      %p161 = scmp.ne.s32.totalorder %s153, %s156
      %p162 = scmp.eq.s32.totalorder %s17, 0
      %p163 = por %p161, %p162
      %p164 = scmp.ne.s32.totalorder %s153, %s156
      %p165 = scmp.eq.s32.totalorder %s22, 1
      %p166 = por %p164, %p165
      %p167 = scmp.ne.s32.totalorder %s156, %s157
      %p168 = scmp.eq.s32.totalorder %s22, 0
      %p169 = por %p167, %p168
      %p170 = scmp.ne.s32.totalorder %s156, %s157
      %p171 = scmp.eq.s32.totalorder %s23, 1
      %p172 = por %p170, %p171
      %p174 = scmp.ne.s32.totalorder %s157, %s173
      %p175 = scmp.eq.s32.totalorder %s23, 0
      %p176 = por %p174, %p175
      %p177 = scmp.le.s32.totalorder 1, %s17
      %p178 = scmp.lt.s32.totalorder %s17, 3
      %p179 = pnand %p177, %p178
      %p180 = pneg %p179
      // Predicated region
      $region9: #{tpu_custom_call.1} parent=5 // pred_check
        _
      $region10: #{tpu_custom_call.1} parent=5 // pred_check_branch
        %182 = sbr.rel (%p179) target = $region12
      $region11: #{tpu_custom_call.1} parent=5 // pred_region
        %s183 = ssub.s32 %s17, 1
        // Predicated region
        $region13: #{tpu_custom_call.1} parent=11 // pred_check
          %p184 = pneg %p78
        $region14: #{tpu_custom_call.1} parent=11 // pred_check_branch
          %186 = sbr.rel (%p184) target = $region16
        $region15: #{tpu_custom_call.1} parent=11 // pred_region
          %s188 = ssub.s32 64, 64
          %189 = vsyncadd [#allocation5], %s188
          %s191 = sshll.u32 %s1, 4
          %s192 = int_to_ptr.vmem [resolvable:$true] %s191
          %194 = dma.vmem_to_smem %s192, 64, [#allocation3], [#allocation5]
        $region16: #{tpu_custom_call.1} parent=11 // pred_fallthru
          _
        // Predicated region
        $region17: #{tpu_custom_call.1} parent=11 // pred_check
          %p195 = pneg %p99
        $region18: #{tpu_custom_call.1} parent=11 // pred_check_branch
          %197 = sbr.rel (%p195) target = $region20
        $region19: #{tpu_custom_call.1} parent=11 // pred_region
          %s199 = ssub.s32 16, 16
          %200 = vsyncadd [#allocation7], %s199
          %s202 = sshll.u32 %s2, 4
          %s203 = int_to_ptr.vmem [resolvable:$true] %s202
          %205 = dma.vmem_to_smem %s203, 16, [#allocation6], [#allocation7]
        $region20: #{tpu_custom_call.1} parent=11 // pred_fallthru
          _
        // Predicated region
        $region21: #{tpu_custom_call.1} parent=11 // pred_check
          %p206 = pneg %p120
        $region22: #{tpu_custom_call.1} parent=11 // pred_check_branch
          %208 = sbr.rel (%p206) target = $region24
        $region23: #{tpu_custom_call.1} parent=11 // pred_region
          %s210 = ssub.s32 16, 16
          %211 = vsyncadd [#allocation7], %s210
          %s213 = sshll.u32 %s3, 4
          %s214 = int_to_ptr.vmem [resolvable:$true] %s213
          %216 = dma.vmem_to_smem %s214, 16, [#allocation8], [#allocation7]
        $region24: #{tpu_custom_call.1} parent=11 // pred_fallthru
          _
        // Predicated region
        $region25: #{tpu_custom_call.1} parent=11 // pred_check
          %p217 = pneg %p141
        $region26: #{tpu_custom_call.1} parent=11 // pred_check_branch
          %219 = sbr.rel (%p217) target = $region28
        $region27: #{tpu_custom_call.1} parent=11 // pred_region
          _
        $region28: #{tpu_custom_call.1} parent=11 // pred_fallthru
          _
      $region12: #{tpu_custom_call.1} parent=5 // pred_fallthru
        _
      %p220 = scmp.lt.s32.totalorder %s17, 2
      // Predicated region
      $region29: #{tpu_custom_call.1} parent=5 // pred_check
        %p221 = pneg %p220
      $region30: #{tpu_custom_call.1} parent=5 // pred_check_branch
        %223 = sbr.rel (%p221) target = $region32
      $region31: #{tpu_custom_call.1} parent=5 // pred_region
        // Predicated region
        $region33: #{tpu_custom_call.1} parent=31 // pred_check
          %p224 = pneg %p51
        $region34: #{tpu_custom_call.1} parent=31 // pred_check_branch
          %226 = sbr.rel (%p224) target = $region36
        $region35: #{tpu_custom_call.1} parent=31 // pred_region
          %s227 = smul.u32 2, %s25
          %p228 = scmp.lt.s32.totalorder %s24, 1
          %s229 = scalar_select %p228, %s24, 1
          %p230 = scmp.lt.s32.totalorder %s227, 1
          %s231 = scalar_select %p230, %s227, 1
          %s232 = smul.addr %s229, 2
          %s233 = sadd.s32 %s231, %s232
          %s234 = smul.addr %s233, 4
          %s235 = scalar_lea.vmem %s0, %s234
          %s236 = smul.u32 2, %s25
        $region36: #{tpu_custom_call.1} parent=31 // pred_fallthru
          _
      $region32: #{tpu_custom_call.1} parent=5 // pred_fallthru
        _
      %p237 = scmp.le.s32.totalorder 1, %s17
      %p238 = scmp.lt.s32.totalorder %s17, 3
      %p239 = pnand %p237, %p238
      %p240 = pneg %p239
      // Predicated region
      $region37: #{tpu_custom_call.1} parent=5 // pred_check
        _
      $region38: #{tpu_custom_call.1} parent=5 // pred_check_branch
        %242 = sbr.rel (%p239) target = $region40
      $region39: #{tpu_custom_call.1} parent=5 // pred_region
        %s243 = ssub.s32 %s17, 1
        // Predicated region
        $region41: #{tpu_custom_call.1} parent=39 // pred_check
          %p244 = pneg %p78
        $region42: #{tpu_custom_call.1} parent=39 // pred_check_branch
          %246 = sbr.rel (%p244) target = $region44
        $region43: #{tpu_custom_call.1} parent=39 // pred_region
          %247 = dma.done [#allocation5], 64
        $region44: #{tpu_custom_call.1} parent=39 // pred_fallthru
          _
        // Predicated region
        $region45: #{tpu_custom_call.1} parent=39 // pred_check
          %p248 = pneg %p99
        $region46: #{tpu_custom_call.1} parent=39 // pred_check_branch
          %250 = sbr.rel (%p248) target = $region48
        $region47: #{tpu_custom_call.1} parent=39 // pred_region
          %251 = dma.done [#allocation7], 16
        $region48: #{tpu_custom_call.1} parent=39 // pred_fallthru
          _
        // Predicated region
        $region49: #{tpu_custom_call.1} parent=39 // pred_check
          %p252 = pneg %p120
        $region50: #{tpu_custom_call.1} parent=39 // pred_check_branch
          %254 = sbr.rel (%p252) target = $region52
        $region51: #{tpu_custom_call.1} parent=39 // pred_region
          %255 = dma.done [#allocation7], 16
        $region52: #{tpu_custom_call.1} parent=39 // pred_fallthru
          _
        %256 = sfence
        %s257 = smul.u32 2, %s27
        %p258 = scmp.lt.s32.totalorder %s26, 1
        %s259 = scalar_select %p258, %s26, 1
        %p260 = scmp.lt.s32.totalorder %s257, 1
        %s261 = scalar_select %p260, %s257, 1
        %s262 = smul.addr %s259, 2
        %s263 = sadd.s32 %s261, %s262
        %s264 = smul.addr %s263, 4
        %s265 = scalar_lea.vmem %s0, %s264
        %p266 = pneg %p57
        %p267 = pneg %p54
        %p268 = pneg %p78
        %p269 = pneg %p75
        %p270 = pneg %p99
        %p271 = pneg %p96
        %p272 = pneg %p120
        %p273 = pneg %p117
        %p274 = pneg %p141
        %p275 = pneg %p138
        %p276 = pneg %p169
        %p277 = pneg %p166
        %s278 = sand.u32 %s156, 1
        %s279 = scalar_lea.sflag [#allocation4], %s278
        %s280 = sand.u32 %s156, 1
        %s281 = smul.addr %s280, 2
        %s282 = scalar_lea.vmem [#allocation9], %s281
        %s283 = smul.u32 2, %s27
        %p284 = scmp.lt.s32.totalorder %s26, 1
        %s285 = scalar_select %p284, %s26, 1
        %p286 = scmp.lt.s32.totalorder %s283, 1
        %s287 = scalar_select %p286, %s283, 1
        %s288 = smul.addr %s285, 2
        %s289 = sadd.s32 %s287, %s288
        %s290 = smul.addr %s289, 4
        %s291 = scalar_lea.vmem %s0, %s290
        %s292 = smul.u32 2, %s27
        %s293 = smul.u32 2, %s27
        %v294 = vld [vmem:[%s291] sm:$0x77]
        %s295 = sld [smem:[#allocation3]]
        %v296 = vstv %s295
        %v297 = vmul.f32 %v296, %v294
        %s298 = sld [smem:[#allocation3 + $0x1]]
        %v299 = vstv %s298
        %v300 = vmul.f32 %v299, %v294
        %v302 = vrot.slane %v300, 5
        %v303 = vrot.slane %v302, 4
        %v305 = vadd.f32 %v297, %v303
        %s306 = sld [smem:[#allocation3 + $0x2]]
        %v307 = vstv %s306
        %v308 = vmul.f32 %v307, %v294
        %v310 = vrot.slane %v308, 6
        %v311 = vrot.slane %v310, 4
        %v313 = vadd.f32 %v305, %v311
        %s314 = sld [smem:[#allocation6]]
        %v315 = vstv %s314
        %v316 = vadd.f32 %v313, %v315
        %s317 = sld [smem:[#allocation3 + $0x80]]
        %v318 = vstv %s317
        %v319 = vmul.f32 %v318, %v294
        %s320 = sld [smem:[#allocation3 + $0x81]]
        %v321 = vstv %s320
        %v322 = vmul.f32 %v321, %v294
        %v324 = vrot.slane %v322, 5
        %v325 = vrot.slane %v324, 4
        %v327 = vadd.f32 %v319, %v325
        %s328 = sld [smem:[#allocation3 + $0x82]]
        %v329 = vstv %s328
        %v330 = vmul.f32 %v329, %v294
        %v332 = vrot.slane %v330, 6
        %v333 = vrot.slane %v332, 4
        %v335 = vadd.f32 %v327, %v333
        %s336 = sld [smem:[#allocation6 + $0x1]]
        %v337 = vstv %s336
        %v338 = vadd.f32 %v335, %v337
        %s339 = sld [smem:[#allocation3 + $0x100]]
        %v340 = vstv %s339
        %v341 = vmul.f32 %v340, %v294
        %s342 = sld [smem:[#allocation3 + $0x101]]
        %v343 = vstv %s342
        %v344 = vmul.f32 %v343, %v294
        %v346 = vrot.slane %v344, 5
        %v347 = vrot.slane %v346, 4
        %v349 = vadd.f32 %v341, %v347
        %s350 = sld [smem:[#allocation3 + $0x102]]
        %v351 = vstv %s350
        %v352 = vmul.f32 %v351, %v294
        %v354 = vrot.slane %v352, 6
        %v355 = vrot.slane %v354, 4
        %v357 = vadd.f32 %v349, %v355
        %s358 = sld [smem:[#allocation6 + $0x2]]
        %v359 = vstv %s358
        %v360 = vadd.f32 %v357, %v359
        %v361 = vxor.u32 %v316, 2147483648
        %v362 = vmul.f32 %v361, 1.442695
        %v363 = vpow.pop %v362
        %v364 = vadd.f32 %v363, 1.0
        %v365 = vrcp.pop %v364
        %v366 = vmul.f32 1.0, %v365
        %v367 = vmul.f32 %v316, %v366
        %v368 = vxor.u32 %v338, 2147483648
        %v369 = vmul.f32 %v368, 1.442695
        %v370 = vpow.pop %v369
        %v371 = vadd.f32 %v370, 1.0
        %v372 = vrcp.pop %v371
        %v373 = vmul.f32 1.0, %v372
        %v374 = vmul.f32 %v338, %v373
        %v375 = vxor.u32 %v360, 2147483648
        %v376 = vmul.f32 %v375, 1.442695
        %v377 = vpow.pop %v376
        %v378 = vadd.f32 %v377, 1.0
        %v379 = vrcp.pop %v378
        %v380 = vmul.f32 1.0, %v379
        %v381 = vmul.f32 %v360, %v380
        %s382 = sld [smem:[#allocation8]]
        %v383 = vstv %s382
        %v384 = vmul.f32 %v383, %v367
        %s385 = sld [smem:[#allocation8 + $0x1]]
        %v386 = vstv %s385
        %v387 = vmul.f32 %v386, %v374
        %v388 = vadd.f32 %v384, %v387
        %s389 = sld [smem:[#allocation8 + $0x2]]
        %v390 = vstv %s389
        %v391 = vmul.f32 %v390, %v381
        %v392 = vadd.f32 %v388, %v391
        %s393 = sld [smem:[#allocation2]]
        %v394 = vstv %s393
        %v395 = vadd.f32 %v392, %v394
        %v398 = vunpack.c.l.s4 1966171168
        %v399 = vunpack.c.0.s8 %v398
        %v400 = vlaneseq
        %v401 = vshrl.u32 %v400, 7
        %v402 = vsub.s32 %v399, %v401
        %v403 = vrot.slane %v395, %v402
        %v405 = vunpack.c.l.s4 1966171168
        %v406 = vunpack.c.0.s8 %v405
        %v407 = vlaneseq
        %v408 = vshrl.u32 %v407, 7
        %v409 = vsub.s32 %v406, %v408
        %v410 = vrot.slane %v403, %v409
        %v412 = vlaneseq
        %vm413 = vcmp.ge.s32.totalorder %v412, 0
        %vm414 = vcmp.lt.s32.totalorder %v412, 256
        %vm415 = vmand %vm413, %vm414
        %416 = vst.msk [vmem:[%s282] sm:$0x3] %vm415, %v410
        %s417 = sand.u32 %s156, 1
        %s418 = scalar_lea.sflag [#allocation4], %s417
        %s419 = sand.u32 %s156, 1
        %s420 = smul.addr %s419, 2
        %s421 = scalar_lea.vmem [#allocation9], %s420
        // Predicated region
        $region53: #{tpu_custom_call.1} parent=39 // pred_check
          %p422 = pneg %p166
        $region54: #{tpu_custom_call.1} parent=39 // pred_check_branch
          %424 = sbr.rel (%p422) target = $region56
        $region55: #{tpu_custom_call.1} parent=39 // pred_region
          %s425 = smul.u32 2, %s27
          %s427 = ssub.s32 32, 32
          %428 = vsyncadd %s418, %s427
          %s429 = smul.addr %s26, 2
          %s430 = sadd.s32 %s425, %s429
          %s431 = smul.addr %s430, 16
          %s432 = scalar_lea.hbm %s5, %s431
          %s434 = sshll.u32 %s421, 4
          %s435 = int_to_ptr.vmem [resolvable:$true] %s434
          %437 = dma.vmem_to_hbm [thread:$0]  %s435, 32, %s432, %s418
        $region56: #{tpu_custom_call.1} parent=39 // pred_fallthru
          _
      $region40: #{tpu_custom_call.1} parent=5 // pred_fallthru
        _
      %p438 = scmp.le.s32.totalorder 2, %s17
      // Predicated region
      $region57: #{tpu_custom_call.1} parent=5 // pred_check
        %p439 = pneg %p438
      $region58: #{tpu_custom_call.1} parent=5 // pred_check_branch
        %441 = sbr.rel (%p439) target = $region60
      $region59: #{tpu_custom_call.1} parent=5 // pred_region
        %s442 = ssub.s32 %s17, 2
        // Predicated region
        $region61: #{tpu_custom_call.1} parent=59 // pred_check
          %p443 = pneg %p172
        $region62: #{tpu_custom_call.1} parent=59 // pred_check_branch
          %445 = sbr.rel (%p443) target = $region64
        $region63: #{tpu_custom_call.1} parent=59 // pred_region
          %s446 = sand.u32 %s157, 1
          %s447 = scalar_lea.sflag [#allocation4], %s446
          %s448 = sand.u32 %s157, 1
          %s449 = smul.addr %s448, 2
          %s450 = scalar_lea.vmem [#allocation9], %s449
          %451 = dma.done %s447, 32
        $region64: #{tpu_custom_call.1} parent=59 // pred_fallthru
          _
      $region60: #{tpu_custom_call.1} parent=5 // pred_fallthru
        _
    $region6: #{tpu_custom_call.1} parent=1 // loop_footer
      %s21 = sadd.s32 1, %s17
    $region7: #{tpu_custom_call.1} parent=1 // loop_footer_branch
      %16 = sbr.rel target = $region3
    $region8: #{tpu_custom_call.1} parent=1 // loop_exit
      _
    %452 = vsyncpa [#allocation4], 1
    %s453 = scalar_lea.sflag [#allocation4], 1
    %454 = vsyncpa %s453, 1
    %455 = vsyncpa [#allocation5], 1
    %s456 = scalar_lea.sflag [#allocation5], 1
    %457 = vsyncpa %s456, 1
    %458 = vsyncpa [#allocation7], 1

</llo_original>
